<compile_context>
chip_gen: v7x
topology: tpu7x:2x2x1
jax: 0.10.0
libtpu: 0.0.40
codegen_flags: <defaults>
</compile_context>

<pallas_src>
import jax
import jax.numpy as jnp
from jax import lax
from jax.experimental import pallas as pl
from jax.experimental.pallas import tpu as pltpu


def _make_kernel(n_chunks, chunk_rows):
    def bert_embeddings_kernel(ids_ref,               # SMEM (B, S) int32 (scalar prefetch)
                               tt_onehot_ref,         # (1, S, T) f32 one-hot token types
                               pos_ref,               # (S, H) f32  position rows 0..S-1
                               word_hbm,              # HBM (V, H) f32 word table (pl.ANY)
                               type_ref,              # (T, H) f32  full token-type table
                               gamma_ref, beta_ref,   # (1, H) f32  LayerNorm affine
                               out_ref,               # (1, S, H) f32 output block
                               wbuf, sems):           # (S, H) VMEM slab, (S,) DMA sems
        b = pl.program_id(0)
        S = wbuf.shape[0]

        # ---- 1) issue every word-row gather DMA for this batch element up front ----
        @pl.loop(0, S)
        def _issue(s):
            wid = ids_ref[b, s]
            pltpu.make_async_copy(word_hbm.at[pl.ds(wid, 1), :],
                                  wbuf.at[pl.ds(s, 1), :],
                                  sems.at[s]).start()

        # ---- 2) per-chunk: wait only this chunk's rows, then add type/pos embeddings,
        #         LayerNorm and store.  Later chunks' DMAs keep flowing meanwhile. ----
        @pl.loop(0, n_chunks)
        def _chunk(c):
            row0 = pl.multiple_of(c * chunk_rows, chunk_rows)

            @pl.loop(0, chunk_rows)
            def _wait(r):
                # descriptor src index is only used for sizing the wait
                pltpu.make_async_copy(word_hbm.at[pl.ds(0, 1), :],
                                      wbuf.at[pl.ds(row0 + r, 1), :],
                                      sems.at[row0 + r]).wait()

            # token-type rows: tiny one-hot matmul on the MXU (replaces S row DMAs)
            onehot = tt_onehot_ref[0, pl.ds(row0, chunk_rows), :]          # (CH, T)
            type_rows = jnp.dot(onehot, type_ref[...],
                                preferred_element_type=jnp.float32)        # (CH, H)

            emb = (wbuf[pl.ds(row0, chunk_rows), :]
                   + type_rows
                   + pos_ref[pl.ds(row0, chunk_rows), :])                   # (CH, H)

            # BertLayerNorm: biased variance, eps=1e-12, f32 statistics
            mu = jnp.mean(emb, axis=-1, keepdims=True)
            xc = emb - mu
            var = jnp.mean(xc * xc, axis=-1, keepdims=True)
            normed = xc * lax.rsqrt(var + 1e-12)

            # dropout(hidden_dropout_prob) in eval mode => identity.
            # TODO(synk): training-mode dropout would use pltpu.prng_seed / prng_random_bits.
            out_ref[0, pl.ds(row0, chunk_rows), :] = (
                normed * gamma_ref[...] + beta_ref[...])                    # lane-dense store

    return bert_embeddings_kernel


def bert_embeddings(input_ids, token_type_ids, params):
    B, S = input_ids.shape
    word = params["word"]                    # (V, H)
    pos = params["pos"]                      # (P, H), P >= S
    ttype = params["type"]                   # (T, H)
    H = word.shape[1]
    T = ttype.shape[0]
    assert S <= pos.shape[0]

    gamma = params["gamma"].reshape(1, H)
    beta = params["beta"].reshape(1, H)
    pos_s = pos[:S]                                          # rows actually used (full-dim block)
    ids = input_ids.astype(jnp.int32)
    tt_onehot = jax.nn.one_hot(token_type_ids.astype(jnp.int32), T,
                               dtype=jnp.float32)            # (B, S, T) — tiny

    # chunking of the wait/compute phase (row counts, multiples of 8 when possible)
    if S % 128 == 0:
        chunk_rows = 128
    elif S % 64 == 0:
        chunk_rows = 64
    else:
        chunk_rows = S
    n_chunks = S // chunk_rows

    grid_spec = pltpu.PrefetchScalarGridSpec(
        num_scalar_prefetch=1,                               # input_ids drive row-gather DMAs
        grid=(B,),
        in_specs=[
            pl.BlockSpec((1, S, T), lambda b, ids: (b, 0, 0)),   # per-batch token-type one-hot
            pl.BlockSpec((S, H), lambda b, ids: (0, 0)),         # position rows 0..S-1
            pl.BlockSpec(memory_space=pl.ANY),                   # word table stays in HBM
            pl.BlockSpec((T, H), lambda b, ids: (0, 0)),         # full token-type table (tiny)
            pl.BlockSpec((1, H), lambda b, ids: (0, 0)),         # LN gamma
            pl.BlockSpec((1, H), lambda b, ids: (0, 0)),         # LN beta
        ],
        out_specs=pl.BlockSpec((1, S, H), lambda b, ids: (b, 0, 0)),
        scratch_shapes=[
            pltpu.VMEM((S, H), jnp.float32),                     # gathered word rows
            pltpu.SemaphoreType.DMA((S,)),                       # per-token gather semaphores
        ],
    )

    # resident set: gather slab + double-buffered {pos, out, one-hot, type table, affine} + margin
    resident = 4 * (S * H + 2 * (2 * S * H + S * T + T * H + 2 * H))
    vmem_bytes = int(min(100 * 2 ** 20, max(4 * 2 ** 20, resident + (2 << 20))))

    return pl.pallas_call(
        _make_kernel(n_chunks, chunk_rows),
        out_shape=jax.ShapeDtypeStruct((B, S, H), jnp.float32),
        grid_spec=grid_spec,
        compiler_params=pltpu.CompilerParams(
            dimension_semantics=("parallel",),                   # shard batch across TCs (v7x)
            vmem_limit_bytes=vmem_bytes,
        ),
    )(ids, tt_onehot, pos_s, word, ttype, gamma, beta)


def bert_embeddings_ref(input_ids, token_type_ids, params):
    # Pure-JAX reference mirroring the torch module (eval mode).
    S = input_ids.shape[1]
    emb = (params["word"][input_ids]
           + params["pos"][:S][None, :, :]
           + params["type"][token_type_ids])
    mu = jnp.mean(emb, axis=-1, keepdims=True)
    var = jnp.mean((emb - mu) ** 2, axis=-1, keepdims=True)
    return ((emb - mu) * lax.rsqrt(var + 1e-12)
            * params["gamma"].reshape(1, 1, -1) + params["beta"].reshape(1, 1, -1))


if __name__ == "__main__":
    # Small config: batch=2, seq=8, hidden=128, vocab=128, max_positions=16, type_vocab=2.
    B, S, H = 2, 8, 128
    V, P, T = 128, 16, 2

    key = jax.random.PRNGKey(0)
    k_ids, k_tt, k_w, k_p, k_t, k_g, k_b = jax.random.split(key, 7)

    params = {
        "word": 0.02 * jax.random.normal(k_w, (V, H), dtype=jnp.float32),
        "pos":  0.02 * jax.random.normal(k_p, (P, H), dtype=jnp.float32),
        "type": 0.02 * jax.random.normal(k_t, (T, H), dtype=jnp.float32),
        "gamma": 1.0 + 0.1 * jax.random.normal(k_g, (H,), dtype=jnp.float32),
        "beta": 0.1 * jax.random.normal(k_b, (H,), dtype=jnp.float32),
    }

    input_ids = jax.random.randint(k_ids, (B, S), 0, V, dtype=jnp.int32)
    token_type_ids = jax.random.randint(k_tt, (B, S), 0, T, dtype=jnp.int32)

    out = bert_embeddings(input_ids, token_type_ids, params)
    out = jax.block_until_ready(out)
    assert out.shape == (B, S, H)

    ref = bert_embeddings_ref(input_ids, token_type_ids, params)
    err = float(jnp.max(jnp.abs(out - ref)))
    assert jnp.allclose(out, ref, atol=1e-5, rtol=1e-5), err

    print("KERNEL_OK")
</pallas_src>

<mosaic_0001>
module attributes {stable_mosaic.version = 11 : i64} {
  func.func @bert_embeddings_kernel(%arg0: i32, %arg1: memref<2x8xi32, #tpu.memory_space<smem>>, %arg2: memref<1x8x2xf32, #tpu.memory_space<vmem>>, %arg3: memref<8x128xf32, #tpu.memory_space<vmem>>, %arg4: memref<128x128xf32, #tpu.memory_space<any>>, %arg5: memref<2x128xf32, #tpu.memory_space<vmem>>, %arg6: memref<1x128xf32, #tpu.memory_space<vmem>>, %arg7: memref<1x128xf32, #tpu.memory_space<vmem>>, %arg8: memref<1x8x128xf32, #tpu.memory_space<vmem>>, %arg9: memref<8x128xf32, #tpu.memory_space<vmem>>, %arg10: memref<8x!tpu.dma_semaphore, #tpu.memory_space<semaphore_mem>>) attributes {dimension_semantics = [#tpu.dimension_semantics<parallel>], iteration_bounds = array<i64: 2>, scalar_prefetch = 1 : i64, scratch_operands = 2 : i64, tpu.core_type = #tpu.core_type<tc>, window_params = [{transform_indices = @transform_0, window_bounds = array<i64: 1, 8, 2>}, {pipeline_mode = #tpu.pipeline_mode<synchronous>, transform_indices = @transform_1, window_bounds = array<i64: 8, 128>}, {}, {pipeline_mode = #tpu.pipeline_mode<synchronous>, transform_indices = @transform_3, window_bounds = array<i64: 2, 128>}, {pipeline_mode = #tpu.pipeline_mode<synchronous>, transform_indices = @transform_4, window_bounds = array<i64: 1, 128>}, {pipeline_mode = #tpu.pipeline_mode<synchronous>, transform_indices = @transform_5, window_bounds = array<i64: 1, 128>}, {transform_indices = @transform_6, window_bounds = array<i64: 1, 8, 128>}]} {
    %c0_i32 = arith.constant 0 : i32
    %c8_i32 = arith.constant 8 : i32
    %0 = arith.addi %c0_i32, %c8_i32 : i32
    %c1_i32 = arith.constant 1 : i32
    scf.for %arg11 = %c0_i32 to %0 step %c1_i32  : i32 {
      %c1_i32_26 = arith.constant 1 : i32
      %43 = arith.muli %arg11, %c1_i32_26 : i32
      %c0_i32_27 = arith.constant 0 : i32
      %44 = arith.addi %c0_i32_27, %43 : i32
      %45 = arith.index_cast %arg0 : i32 to index
      %46 = arith.index_cast %44 : i32 to index
      %47 = memref.load %arg1[%45, %46] : memref<2x8xi32, #tpu.memory_space<smem>>
      %c0_i32_28 = arith.constant 0 : i32
      %48 = tpu.memref_slice %arg4[%47, %c0_i32_28] : memref<128x128xf32, #tpu.memory_space<any>> -> memref<1x128xf32, #tpu.memory_space<any>>
      %c0_i32_29 = arith.constant 0 : i32
      %49 = tpu.memref_slice %arg9[%44, %c0_i32_29] : memref<8x128xf32, #tpu.memory_space<vmem>> -> memref<1x128xf32, #tpu.memory_space<vmem>>
      %50 = tpu.memref_slice %arg10[%44] : memref<8x!tpu.dma_semaphore, #tpu.memory_space<semaphore_mem>> -> memref<1x!tpu.dma_semaphore, #tpu.memory_space<semaphore_mem>>
      %51 = tpu.memref_squeeze %50 : memref<1x!tpu.dma_semaphore, #tpu.memory_space<semaphore_mem>> -> memref<!tpu.dma_semaphore, #tpu.memory_space<semaphore_mem>>
      tpu.enqueue_dma source(%48 : memref<1x128xf32, #tpu.memory_space<any>>) target(%49 : memref<1x128xf32, #tpu.memory_space<vmem>>) target_semaphore(%51 : memref<!tpu.dma_semaphore, #tpu.memory_space<semaphore_mem>>)
    }
    %c8_i32_0 = arith.constant 8 : i32
    %c0_i32_1 = arith.constant 0 : i32
    %c1_i32_2 = arith.constant 1 : i32
    %1 = arith.muli %c0_i32_1, %c1_i32_2 : i32
    %c0_i32_3 = arith.constant 0 : i32
    %2 = arith.addi %c0_i32_3, %1 : i32
    %c8_i32_4 = arith.constant 8 : i32
    %3 = arith.muli %2, %c8_i32_4 : i32
    %4 = tpu.assume_multiple %3, 8 : i32
    %c0_i32_5 = arith.constant 0 : i32
    %c8_i32_6 = arith.constant 8 : i32
    %5 = arith.addi %c0_i32_5, %c8_i32_6 : i32
    %c1_i32_7 = arith.constant 1 : i32
    scf.for %arg11 = %c0_i32_5 to %5 step %c1_i32_7  : i32 {
      %c1_i32_26 = arith.constant 1 : i32
      %43 = arith.muli %arg11, %c1_i32_26 : i32
      %c0_i32_27 = arith.constant 0 : i32
      %44 = arith.addi %c0_i32_27, %43 : i32
      %45 = arith.addi %4, %44 : i32
      %46 = arith.addi %4, %44 : i32
      %c0_i32_28 = arith.constant 0 : i32
      %c0_i32_29 = arith.constant 0 : i32
      %47 = tpu.memref_slice %arg4[%c0_i32_28, %c0_i32_29] : memref<128x128xf32, #tpu.memory_space<any>> -> memref<1x128xf32, #tpu.memory_space<any>>
      %c0_i32_30 = arith.constant 0 : i32
      %48 = tpu.memref_slice %arg9[%45, %c0_i32_30] : memref<8x128xf32, #tpu.memory_space<vmem>> -> memref<1x128xf32, #tpu.memory_space<vmem>>
      %49 = tpu.memref_slice %arg10[%46] : memref<8x!tpu.dma_semaphore, #tpu.memory_space<semaphore_mem>> -> memref<1x!tpu.dma_semaphore, #tpu.memory_space<semaphore_mem>>
      %50 = tpu.memref_squeeze %49 : memref<1x!tpu.dma_semaphore, #tpu.memory_space<semaphore_mem>> -> memref<!tpu.dma_semaphore, #tpu.memory_space<semaphore_mem>>
      tpu.wait_dma2 semaphore(%50 : memref<!tpu.dma_semaphore, #tpu.memory_space<semaphore_mem>>) src(%47 : memref<1x128xf32, #tpu.memory_space<any>>) dst(%48 : memref<1x128xf32, #tpu.memory_space<vmem>>)
    }
    %c8_i32_8 = arith.constant 8 : i32
    %c0 = arith.constant 0 : index
    %6 = arith.index_cast %4 : i32 to index
    %c0_9 = arith.constant 0 : index
    %7 = vector.load %arg2[%c0, %6, %c0_9] : memref<1x8x2xf32, #tpu.memory_space<vmem>>, vector<1x8x2xf32>
    %8 = vector.shape_cast %7 : vector<1x8x2xf32> to vector<8x2xf32>
    %c0_10 = arith.constant 0 : index
    %c0_11 = arith.constant 0 : index
    %9 = vector.load %arg5[%c0_10, %c0_11] : memref<2x128xf32, #tpu.memory_space<vmem>>, vector<2x128xf32>
    %cst = arith.constant dense<0.000000e+00> : vector<8x128xf32>
    %10 = tpu.matmul %8, %9, %cst {dimension_numbers = #tpu.dot_dimension_numbers<[1], [0], [0], [1], [0, 0, 1, 1], [], []>} : vector<8x2xf32>, vector<2x128xf32>, vector<8x128xf32> -> vector<8x128xf32>
    %11 = arith.index_cast %4 : i32 to index
    %c0_12 = arith.constant 0 : index
    %12 = vector.load %arg9[%11, %c0_12] : memref<8x128xf32, #tpu.memory_space<vmem>>, vector<8x128xf32>
    %13 = arith.addf %12, %10 : vector<8x128xf32>
    %14 = arith.index_cast %4 : i32 to index
    %c0_13 = arith.constant 0 : index
    %15 = vector.load %arg3[%14, %c0_13] : memref<8x128xf32, #tpu.memory_space<vmem>>, vector<8x128xf32>
    %16 = arith.addf %13, %15 : vector<8x128xf32>
    %cst_14 = arith.constant dense<0.000000e+00> : vector<8xf32>
    %17 = vector.multi_reduction <add>, %16, %cst_14 [1] : vector<8x128xf32> to vector<8xf32>
    %18 = vector.shape_cast %17 : vector<8xf32> to vector<8x1xf32>
    %cst_15 = arith.constant 1.280000e+02 : f32
    %19 = vector.broadcast %cst_15 : f32 to vector<8x1xf32>
    %20 = arith.divf %18, %19 : vector<8x1xf32>
    %21 = vector.broadcast %20 : vector<8x1xf32> to vector<8x128xf32>
    %22 = arith.subf %16, %21 : vector<8x128xf32>
    %23 = arith.mulf %22, %22 : vector<8x128xf32>
    %cst_16 = arith.constant dense<0.000000e+00> : vector<8xf32>
    %24 = vector.multi_reduction <add>, %23, %cst_16 [1] : vector<8x128xf32> to vector<8xf32>
    %25 = vector.shape_cast %24 : vector<8xf32> to vector<8x1xf32>
    %cst_17 = arith.constant 1.280000e+02 : f32
    %26 = vector.broadcast %cst_17 : f32 to vector<8x1xf32>
    %27 = arith.divf %25, %26 : vector<8x1xf32>
    %cst_18 = arith.constant 9.99999996E-13 : f32
    %28 = vector.broadcast %cst_18 : f32 to vector<8x1xf32>
    %29 = arith.addf %27, %28 : vector<8x1xf32>
    %30 = math.rsqrt %29 : vector<8x1xf32>
    %31 = vector.broadcast %30 : vector<8x1xf32> to vector<8x128xf32>
    %32 = arith.mulf %22, %31 : vector<8x128xf32>
    %c0_19 = arith.constant 0 : index
    %c0_20 = arith.constant 0 : index
    %33 = vector.load %arg6[%c0_19, %c0_20] : memref<1x128xf32, #tpu.memory_space<vmem>>, vector<1x128xf32>
    %34 = vector.broadcast %33 : vector<1x128xf32> to vector<8x128xf32>
    %35 = arith.mulf %32, %34 : vector<8x128xf32>
    %c0_21 = arith.constant 0 : index
    %c0_22 = arith.constant 0 : index
    %36 = vector.load %arg7[%c0_21, %c0_22] : memref<1x128xf32, #tpu.memory_space<vmem>>, vector<1x128xf32>
    %37 = vector.broadcast %36 : vector<1x128xf32> to vector<8x128xf32>
    %38 = arith.addf %35, %37 : vector<8x128xf32>
    %c0_23 = arith.constant 0 : index
    %39 = arith.index_cast %4 : i32 to index
    %c0_24 = arith.constant 0 : index
    %40 = vector.load %arg8[%c0_23, %39, %c0_24] : memref<1x8x128xf32, #tpu.memory_space<vmem>>, vector<1x8x128xf32>
    %41 = vector.shape_cast %40 : vector<1x8x128xf32> to vector<8x128xf32>
    %42 = vector.shape_cast %38 : vector<8x128xf32> to vector<1x8x128xf32>
    tpu.vector_store %arg8[%c0_23, %39, %c0_24], %42 {strides = array<i32>} : memref<1x8x128xf32, #tpu.memory_space<vmem>>, vector<1x8x128xf32>,
    %c1_i32_25 = arith.constant 1 : i32
    return
  }
  func.func @transform_0(%arg0: i32, %arg1: memref<2x8xi32, #tpu.memory_space<smem>>) -> (i32, i32, i32) {
    %c0_i32 = arith.constant 0 : i32
    %c0_i32_0 = arith.constant 0 : i32
    %c0_i32_1 = arith.constant 0 : i32
    return %arg0, %c0_i32, %c0_i32_0 : i32, i32, i32
  }
  func.func @transform_1(%arg0: i32, %arg1: memref<2x8xi32, #tpu.memory_space<smem>>) -> (i32, i32) {
    %c0_i32 = arith.constant 0 : i32
    %c0_i32_0 = arith.constant 0 : i32
    %c0_i32_1 = arith.constant 0 : i32
    return %c0_i32, %c0_i32_0 : i32, i32
  }
  func.func @transform_3(%arg0: i32, %arg1: memref<2x8xi32, #tpu.memory_space<smem>>) -> (i32, i32) {
    %c0_i32 = arith.constant 0 : i32
    %c0_i32_0 = arith.constant 0 : i32
    %c0_i32_1 = arith.constant 0 : i32
    return %c0_i32, %c0_i32_0 : i32, i32
  }
  func.func @transform_4(%arg0: i32, %arg1: memref<2x8xi32, #tpu.memory_space<smem>>) -> (i32, i32) {
    %c0_i32 = arith.constant 0 : i32
    %c0_i32_0 = arith.constant 0 : i32
    %c0_i32_1 = arith.constant 0 : i32
    return %c0_i32, %c0_i32_0 : i32, i32
  }
  func.func @transform_5(%arg0: i32, %arg1: memref<2x8xi32, #tpu.memory_space<smem>>) -> (i32, i32) {
    %c0_i32 = arith.constant 0 : i32
    %c0_i32_0 = arith.constant 0 : i32
    %c0_i32_1 = arith.constant 0 : i32
    return %c0_i32, %c0_i32_0 : i32, i32
  }
  func.func @transform_6(%arg0: i32, %arg1: memref<2x8xi32, #tpu.memory_space<smem>>) -> (i32, i32, i32) {
    %c0_i32 = arith.constant 0 : i32
    %c0_i32_0 = arith.constant 0 : i32
    %c0_i32_1 = arith.constant 0 : i32
    return %arg0, %c0_i32, %c0_i32_0 : i32, i32, i32
  }
}

</mosaic_0001>

<llo_original>
// kernel: tpu_custom_call.1
$region0: #{tpu_custom_call.1}
  #allocation0 [shape = 'u32[]', space=smem, size = 0x4, offset = 0x4, fixed_abs, tag = 'smem constant byte address 0x4 - core index']
  #allocation1 [shape = 'u32[144,128]{1,0:T(1,128)}', space=vmem, size = 0x12000, scoped, tag = 'internal scratch']
  #allocation2 [shape = 'f32[8,128]{1,0:T(8,128)}', space=vmem, size = 0x1000, scoped, tag = 'scratch operand']
  #allocation3 [shape = 's32[8]{0}', space=sflag, size = 0x20, scoped, tag = 'scratch operand']
  #allocation4 [shape = 's32[1]{0}', space=sflag, size = 0x4, scoped, tag = 'scoped memory for tpu_custom_call.1']
  #allocation5 [shape = 'u8[1024]{0}', space=smem, size = 0x400, scoped, tag = 'prefetched SMEM operand 0']
  #allocation8 [shape = 's32[]', space=sflag, size = 0x4, offset = 0, fixed_abs, tag = 'sflag constant byte address 0x0 - dummy sync flag']
  #allocation9 [shape = 's32[]', space=sflag, size = 0x4, offset = 0, fixed_abs, tag = 'sflag constant byte address 0x0 - dummy sync flag']
  #allocation10 [shape = 'u32[]', space=smem, size = 0x4, offset = 0x44, fixed_abs, tag = 'smem constant byte address 0x44 - assertion arg 0']
  #allocation11 [shape = 'u32[]', space=smem, size = 0x4, offset = 0x48, fixed_abs, tag = 'smem constant byte address 0x48 - assertion arg 1']
  %s0 = inlined_call_operand.vmem [shape: s32[2,8], index: 0, kind: input, shape index: {}]
  %s1 = inlined_call_operand.vmem [shape: f32[2,8,2], index: 1, kind: input, shape index: {}]
  %s2 = inlined_call_operand.vmem [shape: f32[8,128], index: 2, kind: input, shape index: {}]
  %s3 = inlined_call_operand.hbm [shape: f32[128,128], index: 3, kind: input, shape index: {}]
  %s4 = inlined_call_operand.vmem [shape: f32[2,128], index: 4, kind: input, shape index: {}]
  %s5 = inlined_call_operand.vmem [shape: f32[1,128], index: 5, kind: input, shape index: {}]
  %s6 = inlined_call_operand.vmem [shape: f32[1,128], index: 6, kind: input, shape index: {}]
  %s7 = inlined_call_operand.hbm [shape: f32[2,8,128], index: 7, kind: output, shape index: {}]
  %s8 = sld [smem:[#allocation0]]
  $region71: #{tpu_custom_call.1} parent=0
    _
  %s10 = ssub.s32 1, %s8
  %s11 = scalar_select 0, %s10, %s8
  %s12 = sshll.u32 %s0, 4
  %s13 = int_to_ptr.vmem [resolvable:$true] %s12
  %15 = dma.vmem_to_smem %s13, 32, [#allocation5], [#allocation4]
  %16 = dma.done [#allocation4], 32
  %17 = sfence
  $region1: #{tpu_custom_call.1} parent=0
    #allocation6 [shape = 'u8[8192]{0}', space=vmem, size = 0x2000, scoped, tag = 'output window, operand 0']
    #allocation7 [shape = 's32[2]{0}', space=sflag, size = 0x8, scoped, tag = 'scoped memory for tpu_custom_call.1']
    %18 = vsyncpa [#allocation7], 0
    %s19 = scalar_lea.sflag [#allocation7], 1
    %20 = vsyncpa %s19, 0
    loop: start=0, step=1, limit=4
    $region2: #{tpu_custom_call.1} parent=1 // loop_pre_header
      _
    $region3: #{tpu_custom_call.1} parent=1 // loop_header
      %s22 = sphi 0, %s26
      %p23 = scmp.ge.s32.totalorder %s22, 4
      %s32 = sphi 0, %s34
      %s35 = sphi 0, %s32
      %s36 = sphi 0, %s35
      %s52 = sphi 0, %s36
      %s56 = sphi 0, %s56
      %s58 = sphi 0, %s56
      %s59 = sphi 0, %s58
      %s73 = sphi 0, %s59
      %s77 = sphi 0, %s77
      %s79 = sphi 0, %s77
      %s80 = sphi 0, %s79
      %s94 = sphi 0, %s80
      %s98 = sphi 0, %s98
      %s100 = sphi 0, %s98
      %s101 = sphi 0, %s100
      %s115 = sphi 0, %s101
      %s119 = sphi 0, %s119
      %s121 = sphi 0, %s119
      %s122 = sphi 0, %s121
      %s136 = sphi 0, %s122
      %s142 = sphi 0, %s144
      %s145 = sphi 0, %s142
      %s146 = sphi 0, %s145
      %s162 = sphi 0, %s146
    $region4: #{tpu_custom_call.1} parent=1 // loop_header_branch
      %25 = sbr.rel (%p23) target = $region8
    $region5: #{tpu_custom_call.1} parent=1 // loop_body
      %s27 = ssub.s32 %s22, 1
      %s28 = ssub.s32 %s22, 2
      %s29 = sadd.s32 %s22, 1
      %s30 = ssub.s32 %s22, %s29
      %p31 = scmp.eq.s32.totalorder %s30, 0
      %s33 = sadd.s32 %s32, 1
      %s34 = scalar_select %p31, %s32, %s33
      %p37 = pneg %p31
      %p38 = scmp.eq.s32.totalorder %s22, 1
      %p39 = por %p37, %p38
      %p40 = scmp.ne.s32.totalorder %s32, %s35
      %p41 = scmp.eq.s32.totalorder %s22, 0
      %p42 = por %p40, %p41
      %p43 = scmp.ne.s32.totalorder %s32, %s35
      %p44 = scmp.eq.s32.totalorder %s27, 1
      %p45 = por %p43, %p44
      %p46 = scmp.ne.s32.totalorder %s35, %s36
      %p47 = scmp.eq.s32.totalorder %s27, 0
      %p48 = por %p46, %p47
      %p49 = scmp.ne.s32.totalorder %s35, %s36
      %p50 = scmp.eq.s32.totalorder %s28, 1
      %p51 = por %p49, %p50
      %p53 = scmp.ne.s32.totalorder %s36, %s52
      %p54 = scmp.eq.s32.totalorder %s28, 0
      %p55 = por %p53, %p54
      %s57 = sadd.s32 %s56, 1
      %p60 = scmp.eq.s32.totalorder %s22, 1
      %p61 = scmp.ne.s32.totalorder %s56, %s58
      %p62 = scmp.eq.s32.totalorder %s22, 0
      %p63 = por %p61, %p62
      %p64 = scmp.ne.s32.totalorder %s56, %s58
      %p65 = scmp.eq.s32.totalorder %s27, 1
      %p66 = por %p64, %p65
      %p67 = scmp.ne.s32.totalorder %s58, %s59
      %p68 = scmp.eq.s32.totalorder %s27, 0
      %p69 = por %p67, %p68
      %p70 = scmp.ne.s32.totalorder %s58, %s59
      %p71 = scmp.eq.s32.totalorder %s28, 1
      %p72 = por %p70, %p71
      %p74 = scmp.ne.s32.totalorder %s59, %s73
      %p75 = scmp.eq.s32.totalorder %s28, 0
      %p76 = por %p74, %p75
      %s78 = sadd.s32 %s77, 1
      %p81 = scmp.eq.s32.totalorder %s22, 1
      %p82 = scmp.ne.s32.totalorder %s77, %s79
      %p83 = scmp.eq.s32.totalorder %s22, 0
      %p84 = por %p82, %p83
      %p85 = scmp.ne.s32.totalorder %s77, %s79
      %p86 = scmp.eq.s32.totalorder %s27, 1
      %p87 = por %p85, %p86
      %p88 = scmp.ne.s32.totalorder %s79, %s80
      %p89 = scmp.eq.s32.totalorder %s27, 0
      %p90 = por %p88, %p89
      %p91 = scmp.ne.s32.totalorder %s79, %s80
      %p92 = scmp.eq.s32.totalorder %s28, 1
      %p93 = por %p91, %p92
      %p95 = scmp.ne.s32.totalorder %s80, %s94
      %p96 = scmp.eq.s32.totalorder %s28, 0
      %p97 = por %p95, %p96
      %s99 = sadd.s32 %s98, 1
      %p102 = scmp.eq.s32.totalorder %s22, 1
      %p103 = scmp.ne.s32.totalorder %s98, %s100
      %p104 = scmp.eq.s32.totalorder %s22, 0
      %p105 = por %p103, %p104
      %p106 = scmp.ne.s32.totalorder %s98, %s100
      %p107 = scmp.eq.s32.totalorder %s27, 1
      %p108 = por %p106, %p107
      %p109 = scmp.ne.s32.totalorder %s100, %s101
      %p110 = scmp.eq.s32.totalorder %s27, 0
      %p111 = por %p109, %p110
      %p112 = scmp.ne.s32.totalorder %s100, %s101
      %p113 = scmp.eq.s32.totalorder %s28, 1
      %p114 = por %p112, %p113
      %p116 = scmp.ne.s32.totalorder %s101, %s115
      %p117 = scmp.eq.s32.totalorder %s28, 0
      %p118 = por %p116, %p117
      %s120 = sadd.s32 %s119, 1
      %p123 = scmp.eq.s32.totalorder %s22, 1
      %p124 = scmp.ne.s32.totalorder %s119, %s121
      %p125 = scmp.eq.s32.totalorder %s22, 0
      %p126 = por %p124, %p125
      %p127 = scmp.ne.s32.totalorder %s119, %s121
      %p128 = scmp.eq.s32.totalorder %s27, 1
      %p129 = por %p127, %p128
      %p130 = scmp.ne.s32.totalorder %s121, %s122
      %p131 = scmp.eq.s32.totalorder %s27, 0
      %p132 = por %p130, %p131
      %p133 = scmp.ne.s32.totalorder %s121, %s122
      %p134 = scmp.eq.s32.totalorder %s28, 1
      %p135 = por %p133, %p134
      %p137 = scmp.ne.s32.totalorder %s122, %s136
      %p138 = scmp.eq.s32.totalorder %s28, 0
      %p139 = por %p137, %p138
      %s140 = ssub.s32 %s22, %s29
      %p141 = scmp.eq.s32.totalorder %s140, 0
      %s143 = sadd.s32 %s142, 1
      %s144 = scalar_select %p141, %s142, %s143
      %p147 = pneg %p141
      %p148 = scmp.eq.s32.totalorder %s22, 1
      %p149 = por %p147, %p148
      %p150 = scmp.ne.s32.totalorder %s142, %s145
      %p151 = scmp.eq.s32.totalorder %s22, 0
      %p152 = por %p150, %p151
      %p153 = scmp.ne.s32.totalorder %s142, %s145
      %p154 = scmp.eq.s32.totalorder %s27, 1
      %p155 = por %p153, %p154
      %p156 = scmp.ne.s32.totalorder %s145, %s146
      %p157 = scmp.eq.s32.totalorder %s27, 0
      %p158 = por %p156, %p157
      %p159 = scmp.ne.s32.totalorder %s145, %s146
      %p160 = scmp.eq.s32.totalorder %s28, 1
      %p161 = por %p159, %p160
      %p163 = scmp.ne.s32.totalorder %s146, %s162
      %p164 = scmp.eq.s32.totalorder %s28, 0
      %p165 = por %p163, %p164
      %p166 = scmp.le.s32.totalorder 1, %s22
      %p167 = scmp.lt.s32.totalorder %s22, 3
      %p168 = pnand %p166, %p167
      %p169 = pneg %p168
      // Predicated region
      $region9: #{tpu_custom_call.1} parent=5 // pred_check
        _
      $region10: #{tpu_custom_call.1} parent=5 // pred_check_branch
        %171 = sbr.rel (%p168) target = $region12
      $region11: #{tpu_custom_call.1} parent=5 // pred_region
        %s172 = ssub.s32 %s22, 1
        // Predicated region
        $region13: #{tpu_custom_call.1} parent=11 // pred_check
          %p173 = pneg %p69
        $region14: #{tpu_custom_call.1} parent=11 // pred_check_branch
          %175 = sbr.rel (%p173) target = $region16
        $region15: #{tpu_custom_call.1} parent=11 // pred_region
          _
        $region16: #{tpu_custom_call.1} parent=11 // pred_fallthru
          _
        // Predicated region
        $region17: #{tpu_custom_call.1} parent=11 // pred_check
          %p176 = pneg %p90
        $region18: #{tpu_custom_call.1} parent=11 // pred_check_branch
          %178 = sbr.rel (%p176) target = $region20
        $region19: #{tpu_custom_call.1} parent=11 // pred_region
          _
        $region20: #{tpu_custom_call.1} parent=11 // pred_fallthru
          _
        // Predicated region
        $region21: #{tpu_custom_call.1} parent=11 // pred_check
          %p179 = pneg %p111
        $region22: #{tpu_custom_call.1} parent=11 // pred_check_branch
          %181 = sbr.rel (%p179) target = $region24
        $region23: #{tpu_custom_call.1} parent=11 // pred_region
          _
        $region24: #{tpu_custom_call.1} parent=11 // pred_fallthru
          _
        // Predicated region
        $region25: #{tpu_custom_call.1} parent=11 // pred_check
          %p182 = pneg %p132
        $region26: #{tpu_custom_call.1} parent=11 // pred_check_branch
          %184 = sbr.rel (%p182) target = $region28
        $region27: #{tpu_custom_call.1} parent=11 // pred_region
          _
        $region28: #{tpu_custom_call.1} parent=11 // pred_fallthru
          _
      $region12: #{tpu_custom_call.1} parent=5 // pred_fallthru
        _
      %p185 = scmp.lt.s32.totalorder %s22, 2
      // Predicated region
      $region29: #{tpu_custom_call.1} parent=5 // pred_check
        %p186 = pneg %p185
      $region30: #{tpu_custom_call.1} parent=5 // pred_check_branch
        %188 = sbr.rel (%p186) target = $region32
      $region31: #{tpu_custom_call.1} parent=5 // pred_region
        // Predicated region
        $region33: #{tpu_custom_call.1} parent=31 // pred_check
          %p189 = pneg %p42
        $region34: #{tpu_custom_call.1} parent=31 // pred_check_branch
          %191 = sbr.rel (%p189) target = $region36
        $region35: #{tpu_custom_call.1} parent=31 // pred_region
          %p192 = scmp.lt.s32.totalorder %s22, 1
          %s193 = scalar_select %p192, %s22, 1
          %s194 = smul.addr %s193, 8
          %s195 = scalar_lea.vmem %s1, %s194
        $region36: #{tpu_custom_call.1} parent=31 // pred_fallthru
          _
      $region32: #{tpu_custom_call.1} parent=5 // pred_fallthru
        _
      %p196 = scmp.le.s32.totalorder 1, %s22
      %p197 = scmp.lt.s32.totalorder %s22, 3
      %p198 = pnand %p196, %p197
      %p199 = pneg %p198
      // Predicated region
      $region37: #{tpu_custom_call.1} parent=5 // pred_check
        _
      $region38: #{tpu_custom_call.1} parent=5 // pred_check_branch
        %201 = sbr.rel (%p198) target = $region40
      $region39: #{tpu_custom_call.1} parent=5 // pred_region
        %s202 = ssub.s32 %s22, 1
        %p203 = scmp.lt.s32.totalorder %s27, 1
        %s204 = scalar_select %p203, %s27, 1
        %s205 = smul.addr %s204, 8
        %s206 = scalar_lea.vmem %s1, %s205
        %p207 = pneg %p48
        %p208 = pneg %p45
        %p209 = pneg %p69
        %p210 = pneg %p66
        %p211 = pneg %p90
        %p212 = pneg %p87
        %p213 = pneg %p111
        %p214 = pneg %p108
        %p215 = pneg %p132
        %p216 = pneg %p129
        %p217 = pneg %p158
        %p218 = pneg %p155
        %s219 = sand.u32 %s145, 1
        %s220 = scalar_lea.sflag [#allocation7], %s219
        %s221 = sand.u32 %s145, 1
        %s222 = smul.addr %s221, 8
        %s223 = scalar_lea.vmem [#allocation6], %s222
        %p224 = scmp.lt.s32.totalorder %s27, 1
        %s225 = scalar_select %p224, %s27, 1
        %s226 = smul.addr %s225, 8
        %s227 = scalar_lea.vmem %s1, %s226
        loop: start=0, step=1, limit=8
        $region41: #{tpu_custom_call.1} parent=39 // loop_pre_header
          _
        $region42: #{tpu_custom_call.1} parent=39 // loop_header
          %s229 = sphi 0, %s233
          %p230 = scmp.ge.s32.totalorder %s229, 8
        $region43: #{tpu_custom_call.1} parent=39 // loop_header_branch
          %232 = sbr.rel (%p230) target = $region47
        $region44: #{tpu_custom_call.1} parent=39 // loop_body
          %s234 = sshra.s32 %s229, 7
          %s235 = sand.u32 %s229, 127
          %s236 = sadd.s32 %s234, %s27
          %s237 = smul.u32 %s236, 128
          %s238 = sshra.s32 %s229, 7
          %s239 = sand.u32 %s229, 127
          %s240 = sadd.s32 %s237, %s239
          %s241 = sld [smem:[#allocation5 + %s240]]
          %s242 = smul.addr %s241, 16
          %s243 = scalar_lea.hbm %s3, %s242
          %s244 = scalar_lea.vmem [#allocation2], %s229
          %s245 = scalar_lea.sflag [#allocation3], %s229
          // Predicated region
          $region48: #{tpu_custom_call.1} parent=44 // pred_check
            _
          $region49: #{tpu_custom_call.1} parent=44 // pred_check_branch
            %247 = sbr.rel target = $region51
          $region50: #{tpu_custom_call.1} parent=44 // pred_region
            %248 = sst [smem:[#allocation10]] [#allocation9]
            %249 = sst [smem:[#allocation11]] [#allocation8]
          $region51: #{tpu_custom_call.1} parent=44 // pred_fallthru
            _
          %251 = shalt.err (0)
          %s253 = sshll.u32 %s244, 4
          %s254 = int_to_ptr.vmem [resolvable:$true] %s253
          %256 = dma.hbm_to_vmem [thread:$0]  %s243, 16, %s254, %s245
        $region45: #{tpu_custom_call.1} parent=39 // loop_footer
          %s233 = sadd.s32 1, %s229
        $region46: #{tpu_custom_call.1} parent=39 // loop_footer_branch
          %228 = sbr.rel target = $region42
        $region47: #{tpu_custom_call.1} parent=39 // loop_exit
          _
        loop: start=0, step=1, limit=8
        $region52: #{tpu_custom_call.1} parent=39 // loop_pre_header
          _
        $region53: #{tpu_custom_call.1} parent=39 // loop_header
          %s258 = sphi 0, %s262
          %p259 = scmp.ge.s32.totalorder %s258, 8
        $region54: #{tpu_custom_call.1} parent=39 // loop_header_branch
          %261 = sbr.rel (%p259) target = $region58
        $region55: #{tpu_custom_call.1} parent=39 // loop_body
          %s263 = sadd.s32 0, %s258
          %s264 = scalar_lea.sflag [#allocation3], %s263
          %s265 = smul.u32 1, 1
          %s266 = sshll.u32 %s265, 4
          %267 = dma.done %s264, %s266
        $region56: #{tpu_custom_call.1} parent=39 // loop_footer
          %s262 = sadd.s32 1, %s258
        $region57: #{tpu_custom_call.1} parent=39 // loop_footer_branch
          %257 = sbr.rel target = $region53
        $region58: #{tpu_custom_call.1} parent=39 // loop_exit
          _
        %v268 = vld [vmem:[%s227] sm:$0xff]
        %v269 = vld [vmem:[%s4] sm:$0x3]
        %vm270 = vcmask 15360
        %v272 = vsel %vm270, %v268, 0
        %vm274 = vcmask 1041408
        %v276 = vsel %vm274, %v269, 0
        %278 = vmatprep.subr.mxu0 0.0
        %279 = vmatpush1.msra.mxu0 %v276
        %280 = vmatprep.subr.mxu0 0.0
        %281 = vmatpush1.msra.mxu0 0.0
        %282 = vmatprep.subr.mxu0 0.0
        %283 = vmatpush1.msra.mxu0 0.0
        %284 = vmatprep.subr.mxu0 0.0
        %285 = vmatpush1.msra.mxu0 0.0
        %286 = vmatprep.subr.mxu0 0.0
        %287 = vmatpush1.msra.mxu0 0.0
        %288 = vmatprep.subr.mxu0 0.0
        %289 = vmatpush1.msra.mxu0 0.0
        %290 = vmatprep.subr.mxu0 0.0
        %291 = vmatpush1.msra.mxu0 0.0
        %292 = vmatprep.subr.mxu0 0.0
        %293 = vmatpush1.msra.mxu0 0.0
        %294 = vmatprep.subr.mxu0 0.0
        %295 = vmatpush1.msra.mxu0 0.0
        %296 = vmatprep.subr.mxu0 0.0
        %297 = vmatpush1.msra.mxu0 0.0
        %298 = vmatprep.subr.mxu0 0.0
        %299 = vmatpush1.msra.mxu0 0.0
        %300 = vmatprep.subr.mxu0 0.0
        %301 = vmatpush1.msra.mxu0 0.0
        %302 = vmatprep.subr.mxu0 0.0
        %303 = vmatpush1.msra.mxu0 0.0
        %304 = vmatprep.subr.mxu0 0.0
        %305 = vmatpush1.msra.mxu0 0.0
        %306 = vmatprep.subr.mxu0 0.0
        %307 = vmatpush1.msra.mxu0 0.0
        %308 = vmatprep.subr.mxu0 0.0
        %309 = vmatpush1.msra.mxu0 0.0
        %310 = vmatprep.subr.mxu0 0.0
        %311 = vmatpush1.msra.mxu0 0.0
        %312 = vmatprep.subr.mxu0 0.0
        %313 = vmatpush1.msra.mxu0 0.0
        %314 = vmatprep.subr.mxu0 0.0
        %315 = vmatpush1.msra.mxu0 0.0
        %316 = vmatprep.subr.mxu0 0.0
        %317 = vmatpush1.msra.mxu0 0.0
        %318 = vmatprep.subr.mxu0 0.0
        %319 = vmatpush1.msra.mxu0 0.0
        %320 = vmatprep.subr.mxu0 0.0
        %321 = vmatpush1.msra.mxu0 0.0
        %322 = vmatprep.subr.mxu0 0.0
        %323 = vmatpush1.msra.mxu0 0.0
        %324 = vmatprep.subr.mxu0 0.0
        %325 = vmatpush1.msra.mxu0 0.0
        %326 = vmatprep.subr.mxu0 0.0
        %327 = vmatpush1.msra.mxu0 0.0
        %328 = vmatprep.subr.mxu0 0.0
        %329 = vmatpush1.msra.mxu0 0.0
        %330 = vmatprep.subr.mxu0 0.0
        %331 = vmatpush1.msra.mxu0 0.0
        %332 = vmatprep.subr.mxu0 0.0
        %333 = vmatpush1.msra.mxu0 0.0
        %334 = vmatprep.subr.mxu0 0.0
        %335 = vmatpush1.msra.mxu0 0.0
        %336 = vmatprep.subr.mxu0 0.0
        %337 = vmatpush1.msra.mxu0 0.0
        %338 = vmatprep.subr.mxu0 0.0
        %339 = vmatpush1.msra.mxu0 0.0
        %340 = vmatprep.subr.mxu0 0.0
        %341 = vmatpush1.msra.mxu0 0.0
        %342 = vmatprep.mubr.f32.mxu0 0.0
        %343 = vmatmul.mubr.f32.gmra.mrb[0].mxu0 %v272
        %v344 = vpop.f32.mrb[0].mxu0
        %v345 = vadd.f32 0.0, %v344
        %v346 = vpop.f32.mrb[0].mxu0
        %347 = vdwg.mxu0
        %v348 = vld [vmem:[#allocation2] sm:$0xff]
        %v349 = vadd.f32 %v348, %v345
        %v350 = vld [vmem:[%s2] sm:$0xff]
        %v351 = vadd.f32 %v349, %v350
        %352 = vadd.xlane.f32.xlu0 %v351
        %v353 = vpop.xlane.xlu0 %352
        %v354 = vrcp.pop 128.0
        %v355 = vmul.f32 %v353, %v354
        %v356 = vsub.f32 %v351, %v355
        %v357 = vmul.f32 %v356, %v356
        %358 = vadd.xlane.f32.xlu0 %v357
        %v359 = vpop.xlane.xlu0 %358
        %v360 = vmul.f32 %v359, %v354
        %v361 = vadd.f32 %v360, 1e-12
        %v362 = vrsqrt.pop %v361
        %v363 = vmul.f32 %v356, %v362
        %v364 = vld [vmem:[%s5] sm:$0x1]
        %v366 = vlaneseq
        %v367 = vshrl.u32 %v366, 7
        %v368 = vsub.s32 0, %v367
        %v369 = vrot.slane %v364, %v368
        %v371 = vmul.f32 %v363, %v369
        %v372 = vld [vmem:[%s6] sm:$0x1]
        %v374 = vlaneseq
        %v375 = vshrl.u32 %v374, 7
        %v376 = vsub.s32 0, %v375
        %v377 = vrot.slane %v372, %v376
        %v379 = vadd.f32 %v371, %v377
        %380 = vst [vmem:[%s223] sm:$0xff] %v379
        %s381 = sand.u32 %s145, 1
        %s382 = scalar_lea.sflag [#allocation7], %s381
        %s383 = sand.u32 %s145, 1
        %s384 = smul.addr %s383, 8
        %s385 = scalar_lea.vmem [#allocation6], %s384
        // Predicated region
        $region59: #{tpu_custom_call.1} parent=39 // pred_check
          %p386 = pneg %p155
        $region60: #{tpu_custom_call.1} parent=39 // pred_check_branch
          %388 = sbr.rel (%p386) target = $region62
        $region61: #{tpu_custom_call.1} parent=39 // pred_region
          %s390 = ssub.s32 128, 128
          %391 = vsyncadd %s382, %s390
          %s392 = smul.addr %s27, 128
          %s393 = scalar_lea.hbm %s7, %s392
          %s395 = sshll.u32 %s385, 4
          %s396 = int_to_ptr.vmem [resolvable:$true] %s395
          %398 = dma.vmem_to_hbm [thread:$0]  %s396, 128, %s393, %s382
        $region62: #{tpu_custom_call.1} parent=39 // pred_fallthru
          _
      $region40: #{tpu_custom_call.1} parent=5 // pred_fallthru
        _
      %p399 = scmp.le.s32.totalorder 2, %s22
      // Predicated region
      $region63: #{tpu_custom_call.1} parent=5 // pred_check
        %p400 = pneg %p399
      $region64: #{tpu_custom_call.1} parent=5 // pred_check_branch
        %402 = sbr.rel (%p400) target = $region66
      $region65: #{tpu_custom_call.1} parent=5 // pred_region
        %s403 = ssub.s32 %s22, 2
        // Predicated region
        $region67: #{tpu_custom_call.1} parent=65 // pred_check
          %p404 = pneg %p161
        $region68: #{tpu_custom_call.1} parent=65 // pred_check_branch
          %406 = sbr.rel (%p404) target = $region70
        $region69: #{tpu_custom_call.1} parent=65 // pred_region
          %s407 = sand.u32 %s146, 1
          %s408 = scalar_lea.sflag [#allocation7], %s407
          %s409 = sand.u32 %s146, 1
          %s410 = smul.addr %s409, 8
          %s411 = scalar_lea.vmem [#allocation6], %s410
          %412 = dma.done %s408, 128
        $region70: #{tpu_custom_call.1} parent=65 // pred_fallthru
          _
      $region66: #{tpu_custom_call.1} parent=5 // pred_fallthru
        _
    $region6: #{tpu_custom_call.1} parent=1 // loop_footer
      %s26 = sadd.s32 1, %s22
    $region7: #{tpu_custom_call.1} parent=1 // loop_footer_branch
      %21 = sbr.rel target = $region3
    $region8: #{tpu_custom_call.1} parent=1 // loop_exit
      _
    %413 = vsyncpa [#allocation7], 1
    %s414 = scalar_lea.sflag [#allocation7], 1
    %415 = vsyncpa %s414, 1
  %416 = vsyncmov [#allocation3]
  %s417 = vpop.sfrf %416
  %p418 = scmp.eq.s32.totalorder %s417, 0
  %p419 = pneg %p418
  %421 = shalt.err (%p419)
  %s422 = scalar_lea.sflag [#allocation3], 1
  %423 = vsyncmov %s422
  %s424 = vpop.sfrf %423
  %p425 = scmp.eq.s32.totalorder %s424, 0
  %p426 = pneg %p425
  %428 = shalt.err (%p426)
  %s429 = scalar_lea.sflag [#allocation3], 2
  %430 = vsyncmov %s429
  %s431 = vpop.sfrf %430
  %p432 = scmp.eq.s32.totalorder %s431, 0
  %p433 = pneg %p432
  %435 = shalt.err (%p433)
  %s436 = scalar_lea.sflag [#allocation3], 3
  %437 = vsyncmov %s436
  %s438 = vpop.sfrf %437
  %p439 = scmp.eq.s32.totalorder %s438, 0
  %p440 = pneg %p439
  %442 = shalt.err (%p440)
  %s443 = scalar_lea.sflag [#allocation3], 4
  %444 = vsyncmov %s443
  %s445 = vpop.sfrf %444
  %p446 = scmp.eq.s32.totalorder %s445, 0
  %p447 = pneg %p446
  %449 = shalt.err (%p447)
  %s450 = scalar_lea.sflag [#allocation3], 5
  %451 = vsyncmov %s450
  %s452 = vpop.sfrf %451
  %p453 = scmp.eq.s32.totalorder %s452, 0
  %p454 = pneg %p453
  %456 = shalt.err (%p454)
  %s457 = scalar_lea.sflag [#allocation3], 6
  %458 = vsyncmov %s457
  %s459 = vpop.sfrf %458
  %p460 = scmp.eq.s32.totalorder %s459, 0
  %p461 = pneg %p460
  %463 = shalt.err (%p461)
  %s464 = scalar_lea.sflag [#allocation3], 7
  %465 = vsyncmov %s464
  %s466 = vpop.sfrf %465
  %p467 = scmp.eq.s32.totalorder %s466, 0
  %p468 = pneg %p467
  %470 = shalt.err (%p468)

</llo_original>
